<compile_context>
chip_gen: v6e
topology: v6e:2x2x1
jax: 0.10.0
libtpu: 0.0.40
codegen_flags: <defaults>
</compile_context>

<pallas_src>
import functools

import jax
import jax.numpy as jnp
from jax.experimental import pallas as pl
from jax.experimental.pallas import tpu as pltpu


# ----------------------------- kernels -------------------------------------- #

def _gh_fullk_kernel(x_ref, wf_ref, bf_ref, o_ref, *, tn):
    """Full-K variant: one dot per (i, j) tile, epilogue fused, no scratch."""
    acc = jnp.dot(x_ref[...], wf_ref[...], preferred_element_type=jnp.float32)
    acc = acc + bf_ref[...].astype(jnp.float32)          # bias (zeros in hw half)
    h = acc[:, :tn]                                       # highway pre-activation
    g = jax.nn.sigmoid(acc[:, tn:])                       # gate
    o_ref[...] = (g * h).astype(o_ref.dtype)


def _gh_ktiled_kernel(x_ref, wf_ref, bf_ref, o_ref, acc_ref, *, tn):
    """K-tiled variant: fp32 VMEM accumulator, bias-initialized at k == 0."""
    k = pl.program_id(2)

    @pl.when(k == 0)
    def _():
        acc_ref[...] = jnp.broadcast_to(
            bf_ref[...].astype(jnp.float32), acc_ref.shape)

    acc_ref[...] += jnp.dot(x_ref[...], wf_ref[...],
                            preferred_element_type=jnp.float32)

    @pl.when(k == pl.num_programs(2) - 1)
    def _():
        acc = acc_ref[...]
        o_ref[...] = (jax.nn.sigmoid(acc[:, tn:]) * acc[:, :tn]).astype(o_ref.dtype)


# ----------------------------- wrapper -------------------------------------- #

def _round_up(x, m):
    return ((x + m - 1) // m) * m


def _pick_tile(dim, preferred, unit):
    """Multiple of `unit`, <= `preferred`, dividing round_up(dim, unit) if possible."""
    padded = _round_up(dim, unit)
    pref = max(unit, (preferred // unit) * unit)
    if padded <= pref:
        return padded
    t = pref
    while t >= unit:
        if padded % t == 0:
            return t
        t -= unit
    return pref        # no divisor found; wrapper pads the dimension up further


def gated_highway(x, w_hw, w_gate, b_gate, *,
                  block_m=512, block_n=512, block_k=None):
    """GatedHighway forward.

    x:      [..., D]   activation (cast to the weight dtype, mirroring torch)
    w_hw:   [D, Dout]  highway weight stored as [in, out] (torch weight transposed)
    w_gate: [D, Dout]  gate weight   stored as [in, out]
    b_gate: [1, Dout]  gate bias (fp32)
    """
    orig_shape = x.shape
    D = orig_shape[-1]
    Dout = w_hw.shape[1]
    dtype = w_hw.dtype

    x2 = x.reshape(-1, D).astype(dtype)                   # bf16 MXU operands
    M = x2.shape[0]

    # --- tile selection --------------------------------------------------- #
    tm = _pick_tile(M, block_m, 16)                       # bf16 sublane packing
    n_unit = 256 if block_n >= 256 else 128               # MXU-256 on v6e/v7x
    tn = _pick_tile(Dout, block_n, n_unit)
    if block_k is None:
        # Prefer the full-K kernel (no accumulator RMW) for Gemma-sized D.
        block_k = 4096 if D <= 4096 else 1536
    tk = _pick_tile(D, block_k, 128)

    Mp = _round_up(M, tm)
    Np = _round_up(Dout, tn)
    Kp = _round_up(D, tk)

    # v7x has 2 TensorCores: keep at least 2 parallel output tiles to shard.
    if (Mp // tm) * (Np // tn) < 2 and tm >= 32:
        tm = max(16, _round_up(tm // 2, 16))
        Mp = _round_up(M, tm)

    grid_m, grid_n, grid_k = Mp // tm, Np // tn, Kp // tk

    # --- pad ragged shapes with zeros (exact: sigmoid(0)*0 == 0, sliced off) --- #
    if (Mp, Kp) != (M, D):
        x2 = jnp.pad(x2, ((0, Mp - M), (0, Kp - D)))
    b_p = b_gate.reshape(1, Dout).astype(jnp.float32)
    w_hw_p, w_gate_p = w_hw, w_gate
    if (Kp, Np) != (D, Dout):
        w_hw_p = jnp.pad(w_hw, ((0, Kp - D), (0, Np - Dout)))
        w_gate_p = jnp.pad(w_gate, ((0, Kp - D), (0, Np - Dout)))
        b_p = jnp.pad(b_p, ((0, 0), (0, Np - Dout)))

    # --- fuse the two weights (tile-interleaved along the out dim) --------- #
    # Output block j sees fused columns [j*2tn, (j+1)*2tn) = [hw_j | gate_j],
    # so a single (tk, 2*tn) block feeds ONE MXU dot per grid step.
    # TODO(synk): in a real model, store the fused/interleaved weight once instead
    # of rebuilding it per call.
    nb = Np // tn
    wf = jnp.concatenate(
        [w_hw_p.reshape(Kp, nb, tn), w_gate_p.reshape(Kp, nb, tn)], axis=2
    ).reshape(Kp, 2 * Np).astype(dtype)
    bf = jnp.concatenate(
        [jnp.zeros((1, nb, tn), jnp.float32), b_p.reshape(1, nb, tn)], axis=2
    ).reshape(1, 2 * Np)

    # --- VMEM budget (double-buffered streams + accumulator), capped for v7x --- #
    kblk = Kp if grid_k == 1 else tk
    est = (2 * tm * kblk * 2            # x
           + 2 * kblk * (2 * tn) * 2    # fused weights
           + 2 * (2 * tn) * 4           # fused bias
           + 2 * tm * tn * 2)           # output
    if grid_k > 1:
        est += tm * (2 * tn) * 4        # fp32 accumulator scratch
    vmem_limit = int(min(max(est + (4 << 20), 32 << 20), 56 << 20))

    # --- pallas_call ------------------------------------------------------- #
    if grid_k == 1:
        kernel = functools.partial(_gh_fullk_kernel, tn=tn)
        grid = (grid_m, grid_n)
        in_specs = [
            pl.BlockSpec((tm, Kp), lambda i, j: (i, 0)),          # x
            pl.BlockSpec((Kp, 2 * tn), lambda i, j: (0, j)),      # fused W
            pl.BlockSpec((1, 2 * tn), lambda i, j: (0, j)),       # fused bias
        ]
        out_spec = pl.BlockSpec((tm, tn), lambda i, j: (i, j))
        scratch = []
        semantics = ("parallel", "parallel")
    else:
        kernel = functools.partial(_gh_ktiled_kernel, tn=tn)
        grid = (grid_m, grid_n, grid_k)
        in_specs = [
            pl.BlockSpec((tm, tk), lambda i, j, k: (i, k)),       # x
            pl.BlockSpec((tk, 2 * tn), lambda i, j, k: (k, j)),   # fused W
            pl.BlockSpec((1, 2 * tn), lambda i, j, k: (0, j)),    # fused bias
        ]
        out_spec = pl.BlockSpec((tm, tn), lambda i, j, k: (i, j))
        scratch = [pltpu.VMEM((tm, 2 * tn), jnp.float32)]
        semantics = ("parallel", "parallel", "arbitrary")

    out = pl.pallas_call(
        kernel,
        out_shape=jax.ShapeDtypeStruct((Mp, Np), dtype),
        grid_spec=pltpu.PrefetchScalarGridSpec(
            num_scalar_prefetch=0,
            grid=grid,
            in_specs=in_specs,
            out_specs=out_spec,
            scratch_shapes=scratch,
        ),
        compiler_params=pltpu.CompilerParams(
            dimension_semantics=semantics,
            vmem_limit_bytes=vmem_limit),
    )(x2, wf, bf)

    out = out[:M, :Dout]
    return out.reshape(*orig_shape[:-1], Dout)


# ----------------------------- reference + main ----------------------------- #

def gated_highway_ref(x, w_hw, w_gate, b_gate):
    xf = x.astype(jnp.float32)
    h = xf @ w_hw.astype(jnp.float32)
    g = jax.nn.sigmoid(xf @ w_gate.astype(jnp.float32) + b_gate.astype(jnp.float32))
    return g * h


if __name__ == "__main__":
    B, S, D = 2, 64, 256

    key = jax.random.PRNGKey(0)
    kx, kw, kg, kb = jax.random.split(key, 4)

    x = jax.random.normal(kx, (B, S, D), jnp.float32).astype(jnp.bfloat16)
    # The module zero-initializes these; use random values here so the numeric
    # check is non-trivial.  Stored as [in, out] (torch weight already transposed).
    w_hw = (0.05 * jax.random.normal(kw, (D, D), jnp.float32)).astype(jnp.bfloat16)
    w_gate = (0.05 * jax.random.normal(kg, (D, D), jnp.float32)).astype(jnp.bfloat16)
    b_gate = 0.1 * jax.random.normal(kb, (1, D), jnp.float32)

    ref = gated_highway_ref(x, w_hw, w_gate, b_gate)

    # Default tiles -> full-K kernel (no accumulator, fused epilogue).
    fwd_full = jax.jit(gated_highway)
    out_full = fwd_full(x, w_hw, w_gate, b_gate)
    jax.block_until_ready(out_full)
    assert out_full.shape == (B, S, D) and out_full.dtype == jnp.bfloat16
    err = float(jnp.max(jnp.abs(out_full.astype(jnp.float32) - ref)))
    assert err < 7.5e-2, f"full-K max abs err {err}"
    assert not bool(jnp.any(jnp.isnan(out_full.astype(jnp.float32))))

    # Forced small tiles -> (2, 2, 2) grid, exercises the k-accumulation path.
    fwd_tiled = jax.jit(functools.partial(
        gated_highway, block_m=64, block_n=128, block_k=128))
    out_tiled = fwd_tiled(x, w_hw, w_gate, b_gate)
    jax.block_until_ready(out_tiled)
    err = float(jnp.max(jnp.abs(out_tiled.astype(jnp.float32) - ref)))
    assert err < 7.5e-2, f"k-tiled max abs err {err}"

    # Zero-initialized weights (the module's actual init) must produce exact zeros.
    zero_out = fwd_full(x, jnp.zeros_like(w_hw), jnp.zeros_like(w_gate),
                        jnp.zeros_like(b_gate))
    jax.block_until_ready(zero_out)
    assert not bool(jnp.any(zero_out.astype(jnp.float32) != 0.0))

    print("KERNEL_OK")
</pallas_src>

<mosaic_0001>
module attributes {stable_mosaic.version = 11 : i64} {
  func.func @_gh_fullk_kernel(%arg0: i32, %arg1: i32, %arg2: memref<64x256xbf16, #tpu.memory_space<vmem>>, %arg3: memref<256x512xbf16, #tpu.memory_space<vmem>>, %arg4: memref<1x512xf32, #tpu.memory_space<vmem>>, %arg5: memref<64x256xbf16, #tpu.memory_space<vmem>>) attributes {dimension_semantics = [#tpu.dimension_semantics<parallel>, #tpu.dimension_semantics<parallel>], iteration_bounds = array<i64: 2, 1>, scalar_prefetch = 0 : i64, scratch_operands = 0 : i64, tpu.core_type = #tpu.core_type<tc>, window_params = [{transform_indices = @transform_0, window_bounds = array<i64: 64, 256>}, {transform_indices = @transform_1, window_bounds = array<i64: 256, 512>}, {transform_indices = @transform_2, window_bounds = array<i64: 1, 512>}, {transform_indices = @transform_3, window_bounds = array<i64: 64, 256>}]} {
    %c0 = arith.constant 0 : index
    %c0_0 = arith.constant 0 : index
    %0 = vector.load %arg2[%c0, %c0_0] : memref<64x256xbf16, #tpu.memory_space<vmem>>, vector<64x256xbf16>
    %c0_1 = arith.constant 0 : index
    %c0_2 = arith.constant 0 : index
    %1 = vector.load %arg3[%c0_1, %c0_2] : memref<256x512xbf16, #tpu.memory_space<vmem>>, vector<256x512xbf16>
    %cst = arith.constant dense<0.000000e+00> : vector<64x512xf32>
    %2 = tpu.matmul %0, %1, %cst {dimension_numbers = #tpu.dot_dimension_numbers<[1], [0], [0], [1], [0, 0, 1, 1], [], []>} : vector<64x256xbf16>, vector<256x512xbf16>, vector<64x512xf32> -> vector<64x512xf32>
    %c0_3 = arith.constant 0 : index
    %c0_4 = arith.constant 0 : index
    %3 = vector.load %arg4[%c0_3, %c0_4] : memref<1x512xf32, #tpu.memory_space<vmem>>, vector<1x512xf32>
    %4 = vector.broadcast %3 : vector<1x512xf32> to vector<64x512xf32>
    %5 = arith.addf %2, %4 : vector<64x512xf32>
    %6 = vector.extract_strided_slice %5 {offsets = [0, 0], sizes = [64, 256], strides = [1, 1]} : vector<64x512xf32> to vector<64x256xf32>
    %7 = vector.extract_strided_slice %5 {offsets = [0, 256], sizes = [64, 256], strides = [1, 1]} : vector<64x512xf32> to vector<64x256xf32>
    %8 = arith.negf %7 : vector<64x256xf32>
    %9 = math.exp %8 : vector<64x256xf32>
    %cst_5 = arith.constant 1.000000e+00 : f32
    %10 = vector.broadcast %cst_5 : f32 to vector<64x256xf32>
    %11 = arith.addf %10, %9 : vector<64x256xf32>
    %12 = arith.divf %10, %11 : vector<64x256xf32>
    %13 = arith.mulf %12, %6 : vector<64x256xf32>
    %14 = arith.truncf %13 : vector<64x256xf32> to vector<64x256xbf16>
    %c0_6 = arith.constant 0 : index
    %c0_7 = arith.constant 0 : index
    %15 = vector.load %arg5[%c0_6, %c0_7] : memref<64x256xbf16, #tpu.memory_space<vmem>>, vector<64x256xbf16>
    tpu.vector_store %arg5[%c0_6, %c0_7], %14 {strides = array<i32>} : memref<64x256xbf16, #tpu.memory_space<vmem>>, vector<64x256xbf16>,
    return
  }
  func.func @transform_0(%arg0: i32, %arg1: i32) -> (i32, i32) {
    %c0_i32 = arith.constant 0 : i32
    %c0_i32_0 = arith.constant 0 : i32
    return %arg0, %c0_i32 : i32, i32
  }
  func.func @transform_1(%arg0: i32, %arg1: i32) -> (i32, i32) {
    %c0_i32 = arith.constant 0 : i32
    %c0_i32_0 = arith.constant 0 : i32
    return %c0_i32, %arg1 : i32, i32
  }
  func.func @transform_2(%arg0: i32, %arg1: i32) -> (i32, i32) {
    %c0_i32 = arith.constant 0 : i32
    %c0_i32_0 = arith.constant 0 : i32
    return %c0_i32, %arg1 : i32, i32
  }
  func.func @transform_3(%arg0: i32, %arg1: i32) -> (i32, i32) {
    %c0_i32 = arith.constant 0 : i32
    return %arg0, %arg1 : i32, i32
  }
}

</mosaic_0001>

<llo_original>
// kernel: gated_highway.1
$region0: #{gated_highway.1}
  #allocation0 [shape = 'u32[]', space=smem, size = 0x4, offset = 0x4, fixed_abs, tag = 'smem constant byte address 0x4 - core index']
  #allocation1 [shape = 'u32[144,128]{1,0:T(1,128)}', space=vmem, size = 0x12000, scoped, tag = 'internal scratch']
  %s0 = inlined_call_operand.vmem [shape: bf16[128,256], index: 0, kind: input, shape index: {}]
  %s1 = inlined_call_operand.vmem [shape: bf16[256,512], index: 1, kind: input, shape index: {}]
  %s2 = inlined_call_operand.vmem [shape: f32[1,512], index: 2, kind: input, shape index: {}]
  %s3 = inlined_call_operand.hbm [shape: bf16[128,256], index: 3, kind: output, shape index: {}]
  %s4 = sld [smem:[#allocation0]]
  $region45: #{gated_highway.1} parent=0
    _
  %s6 = ssub.s32 1, %s4
  %s7 = scalar_select 0, %s6, %s4
  $region1: #{gated_highway.1} parent=0
    #allocation2 [shape = 'u8[65536]{0}', space=vmem, size = 0x10000, scoped, tag = 'output window, operand 0']
    #allocation3 [shape = 's32[2]{0}', space=sflag, size = 0x8, scoped, tag = 'scoped memory for gated_highway.1']
    %8 = vsyncpa [#allocation3], 0
    %s9 = scalar_lea.sflag [#allocation3], 1
    %10 = vsyncpa %s9, 0
    loop: start=0, step=1, limit=4
    $region2: #{gated_highway.1} parent=1 // loop_pre_header
      _
    $region3: #{gated_highway.1} parent=1 // loop_header
      %s12 = sphi 0, %s16
      %p13 = scmp.ge.s32.totalorder %s12, 4
      %s19 = sphi 0, %s31
      %s20 = sphi 0, %s27
      %s21 = sphi 0, %s19
      %s22 = sphi 0, %s20
      %s23 = sphi 0, %s21
      %s24 = sphi 0, %s22
      %s34 = sphi 0, %s36
      %s37 = sphi 0, %s34
      %s38 = sphi 0, %s37
      %s54 = sphi 0, %s38
      %s60 = sphi 0, %s62
      %s63 = sphi 0, %s60
      %s64 = sphi 0, %s63
      %s80 = sphi 0, %s64
      %s86 = sphi 0, %s88
      %s89 = sphi 0, %s86
      %s90 = sphi 0, %s89
      %s106 = sphi 0, %s90
      %s114 = sphi 0, %s116
      %s117 = sphi 0, %s114
      %s118 = sphi 0, %s117
      %s134 = sphi 0, %s118
    $region4: #{gated_highway.1} parent=1 // loop_header_branch
      %15 = sbr.rel (%p13) target = $region8
    $region5: #{gated_highway.1} parent=1 // loop_body
      %s17 = ssub.s32 %s12, 1
      %s18 = ssub.s32 %s12, 2
      %s25 = sadd.s32 1, %s20
      %p26 = scmp.ge.s32.totalorder %s25, 1
      %s27 = scalar_select %p26, 0, %s25
      %s28 = sadd.s32 1, %s19
      %s29 = scalar_select %p26, %s28, %s19
      %p30 = scmp.ge.s32.totalorder %s29, 2
      %s31 = scalar_select %p30, 0, %s29
      %s32 = ssub.s32 %s19, %s31
      %p33 = scmp.eq.s32.totalorder %s32, 0
      %s35 = sadd.s32 %s34, 1
      %s36 = scalar_select %p33, %s34, %s35
      %p39 = pneg %p33
      %p40 = scmp.eq.s32.totalorder %s12, 1
      %p41 = por %p39, %p40
      %p42 = scmp.ne.s32.totalorder %s34, %s37
      %p43 = scmp.eq.s32.totalorder %s12, 0
      %p44 = por %p42, %p43
      %p45 = scmp.ne.s32.totalorder %s34, %s37
      %p46 = scmp.eq.s32.totalorder %s17, 1
      %p47 = por %p45, %p46
      %p48 = scmp.ne.s32.totalorder %s37, %s38
      %p49 = scmp.eq.s32.totalorder %s17, 0
      %p50 = por %p48, %p49
      %p51 = scmp.ne.s32.totalorder %s37, %s38
      %p52 = scmp.eq.s32.totalorder %s18, 1
      %p53 = por %p51, %p52
      %p55 = scmp.ne.s32.totalorder %s38, %s54
      %p56 = scmp.eq.s32.totalorder %s18, 0
      %p57 = por %p55, %p56
      %s58 = ssub.s32 %s20, %s27
      %p59 = scmp.eq.s32.totalorder %s58, 0
      %s61 = sadd.s32 %s60, 1
      %s62 = scalar_select %p59, %s60, %s61
      %p65 = pneg %p59
      %p66 = scmp.eq.s32.totalorder %s12, 1
      %p67 = por %p65, %p66
      %p68 = scmp.ne.s32.totalorder %s60, %s63
      %p69 = scmp.eq.s32.totalorder %s12, 0
      %p70 = por %p68, %p69
      %p71 = scmp.ne.s32.totalorder %s60, %s63
      %p72 = scmp.eq.s32.totalorder %s17, 1
      %p73 = por %p71, %p72
      %p74 = scmp.ne.s32.totalorder %s63, %s64
      %p75 = scmp.eq.s32.totalorder %s17, 0
      %p76 = por %p74, %p75
      %p77 = scmp.ne.s32.totalorder %s63, %s64
      %p78 = scmp.eq.s32.totalorder %s18, 1
      %p79 = por %p77, %p78
      %p81 = scmp.ne.s32.totalorder %s64, %s80
      %p82 = scmp.eq.s32.totalorder %s18, 0
      %p83 = por %p81, %p82
      %s84 = ssub.s32 %s20, %s27
      %p85 = scmp.eq.s32.totalorder %s84, 0
      %s87 = sadd.s32 %s86, 1
      %s88 = scalar_select %p85, %s86, %s87
      %p91 = pneg %p85
      %p92 = scmp.eq.s32.totalorder %s12, 1
      %p93 = por %p91, %p92
      %p94 = scmp.ne.s32.totalorder %s86, %s89
      %p95 = scmp.eq.s32.totalorder %s12, 0
      %p96 = por %p94, %p95
      %p97 = scmp.ne.s32.totalorder %s86, %s89
      %p98 = scmp.eq.s32.totalorder %s17, 1
      %p99 = por %p97, %p98
      %p100 = scmp.ne.s32.totalorder %s89, %s90
      %p101 = scmp.eq.s32.totalorder %s17, 0
      %p102 = por %p100, %p101
      %p103 = scmp.ne.s32.totalorder %s89, %s90
      %p104 = scmp.eq.s32.totalorder %s18, 1
      %p105 = por %p103, %p104
      %p107 = scmp.ne.s32.totalorder %s90, %s106
      %p108 = scmp.eq.s32.totalorder %s18, 0
      %p109 = por %p107, %p108
      %s110 = ssub.s32 %s19, %s31
      %s111 = ssub.s32 %s20, %s27
      %s112 = sor.u32 %s110, %s111
      %p113 = scmp.eq.s32.totalorder %s112, 0
      %s115 = sadd.s32 %s114, 1
      %s116 = scalar_select %p113, %s114, %s115
      %p119 = pneg %p113
      %p120 = scmp.eq.s32.totalorder %s12, 1
      %p121 = por %p119, %p120
      %p122 = scmp.ne.s32.totalorder %s114, %s117
      %p123 = scmp.eq.s32.totalorder %s12, 0
      %p124 = por %p122, %p123
      %p125 = scmp.ne.s32.totalorder %s114, %s117
      %p126 = scmp.eq.s32.totalorder %s17, 1
      %p127 = por %p125, %p126
      %p128 = scmp.ne.s32.totalorder %s117, %s118
      %p129 = scmp.eq.s32.totalorder %s17, 0
      %p130 = por %p128, %p129
      %p131 = scmp.ne.s32.totalorder %s117, %s118
      %p132 = scmp.eq.s32.totalorder %s18, 1
      %p133 = por %p131, %p132
      %p135 = scmp.ne.s32.totalorder %s118, %s134
      %p136 = scmp.eq.s32.totalorder %s18, 0
      %p137 = por %p135, %p136
      %p138 = scmp.le.s32.totalorder 1, %s12
      %p139 = scmp.lt.s32.totalorder %s12, 3
      %p140 = pnand %p138, %p139
      %p141 = pneg %p140
      // Predicated region
      $region9: #{gated_highway.1} parent=5 // pred_check
        _
      $region10: #{gated_highway.1} parent=5 // pred_check_branch
        %143 = sbr.rel (%p140) target = $region12
      $region11: #{gated_highway.1} parent=5 // pred_region
        %s144 = ssub.s32 %s12, 1
        // Predicated region
        $region13: #{gated_highway.1} parent=11 // pred_check
          %p145 = pneg %p76
        $region14: #{gated_highway.1} parent=11 // pred_check_branch
          %147 = sbr.rel (%p145) target = $region16
        $region15: #{gated_highway.1} parent=11 // pred_region
          %s148 = smul.u32 4, %s22
          %p149 = scmp.lt.s32.totalorder %s148, 3
          %s150 = scalar_select %p149, %s148, 3
          %s151 = smul.addr %s150, 4
          %s152 = scalar_lea.vmem %s1, %s151
          %s153 = smul.u32 4, %s22
        $region16: #{gated_highway.1} parent=11 // pred_fallthru
          _
        // Predicated region
        $region17: #{gated_highway.1} parent=11 // pred_check
          %p154 = pneg %p102
        $region18: #{gated_highway.1} parent=11 // pred_check_branch
          %156 = sbr.rel (%p154) target = $region20
        $region19: #{gated_highway.1} parent=11 // pred_region
          %s157 = smul.u32 4, %s22
          %p158 = scmp.lt.s32.totalorder %s157, 3
          %s159 = scalar_select %p158, %s157, 3
          %s160 = scalar_lea.vmem %s2, %s159
          %s161 = smul.u32 4, %s22
        $region20: #{gated_highway.1} parent=11 // pred_fallthru
          _
      $region12: #{gated_highway.1} parent=5 // pred_fallthru
        _
      %p162 = scmp.lt.s32.totalorder %s12, 2
      // Predicated region
      $region21: #{gated_highway.1} parent=5 // pred_check
        %p163 = pneg %p162
      $region22: #{gated_highway.1} parent=5 // pred_check_branch
        %165 = sbr.rel (%p163) target = $region24
      $region23: #{gated_highway.1} parent=5 // pred_region
        // Predicated region
        $region25: #{gated_highway.1} parent=23 // pred_check
          %p166 = pneg %p44
        $region26: #{gated_highway.1} parent=23 // pred_check_branch
          %168 = sbr.rel (%p166) target = $region28
        $region27: #{gated_highway.1} parent=23 // pred_region
          %s169 = smul.u32 8, %s19
          %p170 = scmp.lt.s32.totalorder %s169, 15
          %s171 = scalar_select %p170, %s169, 15
          %s172 = smul.addr %s171, 2
          %s173 = smul.addr %s172, 4
          %s174 = scalar_lea.vmem %s0, %s173
          %s175 = smul.u32 8, %s19
        $region28: #{gated_highway.1} parent=23 // pred_fallthru
          _
      $region24: #{gated_highway.1} parent=5 // pred_fallthru
        _
      %p176 = scmp.le.s32.totalorder 1, %s12
      %p177 = scmp.lt.s32.totalorder %s12, 3
      %p178 = pnand %p176, %p177
      %p179 = pneg %p178
      // Predicated region
      $region29: #{gated_highway.1} parent=5 // pred_check
        _
      $region30: #{gated_highway.1} parent=5 // pred_check_branch
        %181 = sbr.rel (%p178) target = $region32
      $region31: #{gated_highway.1} parent=5 // pred_region
        %s182 = ssub.s32 %s12, 1
        %s183 = smul.u32 8, %s21
        %p184 = scmp.lt.s32.totalorder %s183, 15
        %s185 = scalar_select %p184, %s183, 15
        %s186 = smul.addr %s185, 2
        %s187 = smul.addr %s186, 4
        %s188 = scalar_lea.vmem %s0, %s187
        %p189 = pneg %p50
        %p190 = pneg %p47
        %s191 = smul.u32 4, %s22
        %p192 = scmp.lt.s32.totalorder %s191, 3
        %s193 = scalar_select %p192, %s191, 3
        %s194 = smul.addr %s193, 4
        %s195 = scalar_lea.vmem %s1, %s194
        %p196 = pneg %p76
        %p197 = pneg %p73
        %s198 = smul.u32 4, %s22
        %p199 = scmp.lt.s32.totalorder %s198, 3
        %s200 = scalar_select %p199, %s198, 3
        %s201 = scalar_lea.vmem %s2, %s200
        %p202 = pneg %p102
        %p203 = pneg %p99
        %p204 = pneg %p130
        %p205 = pneg %p127
        %s206 = sand.u32 %s117, 1
        %s207 = scalar_lea.sflag [#allocation3], %s206
        %s208 = sand.u32 %s117, 1
        %s209 = smul.addr %s208, 64
        %s210 = scalar_lea.vmem [#allocation2], %s209
        %s211 = smul.u32 8, %s21
        %p212 = scmp.lt.s32.totalorder %s211, 15
        %s213 = scalar_select %p212, %s211, 15
        %s214 = smul.addr %s213, 2
        %s215 = smul.addr %s214, 4
        %s216 = scalar_lea.vmem %s0, %s215
        %s217 = smul.u32 8, %s21
        %s218 = smul.u32 4, %s22
        %p219 = scmp.lt.s32.totalorder %s218, 3
        %s220 = scalar_select %p219, %s218, 3
        %s221 = smul.addr %s220, 4
        %s222 = scalar_lea.vmem %s1, %s221
        %s223 = smul.u32 4, %s22
        %s224 = smul.u32 4, %s22
        %p225 = scmp.lt.s32.totalorder %s224, 3
        %s226 = scalar_select %p225, %s224, 3
        %s227 = scalar_lea.vmem %s2, %s226
        %s228 = smul.u32 4, %s22
        %s229 = smul.u32 8, %s21
        %s230 = smul.u32 2, %s22
        %v231 = vld [vmem:[%s216] sm:$0xff]
        %v232 = vld [vmem:[%s216 + $0x8] sm:$0xff]
        %v233 = vld [vmem:[%s216 + $0x10] sm:$0xff]
        %v234 = vld [vmem:[%s216 + $0x18] sm:$0xff]
        %v235 = vld [vmem:[%s216 + $0x20] sm:$0xff]
        %v236 = vld [vmem:[%s216 + $0x28] sm:$0xff]
        %v237 = vld [vmem:[%s216 + $0x30] sm:$0xff]
        %v238 = vld [vmem:[%s216 + $0x38] sm:$0xff]
        %v239 = vld [vmem:[%s222] sm:$0xff]
        %v240 = vld [vmem:[%s222 + $0x8] sm:$0xff]
        %v241 = vld [vmem:[%s222 + $0x10] sm:$0xff]
        %v242 = vld [vmem:[%s222 + $0x18] sm:$0xff]
        %v243 = vld [vmem:[%s222 + $0x20] sm:$0xff]
        %v244 = vld [vmem:[%s222 + $0x28] sm:$0xff]
        %v245 = vld [vmem:[%s222 + $0x30] sm:$0xff]
        %v246 = vld [vmem:[%s222 + $0x38] sm:$0xff]
        %v247 = vld [vmem:[%s222 + $0x40] sm:$0xff]
        %v248 = vld [vmem:[%s222 + $0x48] sm:$0xff]
        %v249 = vld [vmem:[%s222 + $0x50] sm:$0xff]
        %v250 = vld [vmem:[%s222 + $0x58] sm:$0xff]
        %v251 = vld [vmem:[%s222 + $0x60] sm:$0xff]
        %v252 = vld [vmem:[%s222 + $0x68] sm:$0xff]
        %v253 = vld [vmem:[%s222 + $0x70] sm:$0xff]
        %v254 = vld [vmem:[%s222 + $0x78] sm:$0xff]
        %v255 = vld [vmem:[%s222 + $0x80] sm:$0xff]
        %v256 = vld [vmem:[%s222 + $0x88] sm:$0xff]
        %v257 = vld [vmem:[%s222 + $0x90] sm:$0xff]
        %v258 = vld [vmem:[%s222 + $0x98] sm:$0xff]
        %v259 = vld [vmem:[%s222 + $0xa0] sm:$0xff]
        %v260 = vld [vmem:[%s222 + $0xa8] sm:$0xff]
        %v261 = vld [vmem:[%s222 + $0xb0] sm:$0xff]
        %v262 = vld [vmem:[%s222 + $0xb8] sm:$0xff]
        %v263 = vld [vmem:[%s222 + $0xc0] sm:$0xff]
        %v264 = vld [vmem:[%s222 + $0xc8] sm:$0xff]
        %v265 = vld [vmem:[%s222 + $0xd0] sm:$0xff]
        %v266 = vld [vmem:[%s222 + $0xd8] sm:$0xff]
        %v267 = vld [vmem:[%s222 + $0xe0] sm:$0xff]
        %v268 = vld [vmem:[%s222 + $0xe8] sm:$0xff]
        %v269 = vld [vmem:[%s222 + $0xf0] sm:$0xff]
        %v270 = vld [vmem:[%s222 + $0xf8] sm:$0xff]
        %v271 = vld [vmem:[%s222 + $0x100] sm:$0xff]
        %v272 = vld [vmem:[%s222 + $0x108] sm:$0xff]
        %v273 = vld [vmem:[%s222 + $0x110] sm:$0xff]
        %v274 = vld [vmem:[%s222 + $0x118] sm:$0xff]
        %v275 = vld [vmem:[%s222 + $0x120] sm:$0xff]
        %v276 = vld [vmem:[%s222 + $0x128] sm:$0xff]
        %v277 = vld [vmem:[%s222 + $0x130] sm:$0xff]
        %v278 = vld [vmem:[%s222 + $0x138] sm:$0xff]
        %v279 = vld [vmem:[%s222 + $0x140] sm:$0xff]
        %v280 = vld [vmem:[%s222 + $0x148] sm:$0xff]
        %v281 = vld [vmem:[%s222 + $0x150] sm:$0xff]
        %v282 = vld [vmem:[%s222 + $0x158] sm:$0xff]
        %v283 = vld [vmem:[%s222 + $0x160] sm:$0xff]
        %v284 = vld [vmem:[%s222 + $0x168] sm:$0xff]
        %v285 = vld [vmem:[%s222 + $0x170] sm:$0xff]
        %v286 = vld [vmem:[%s222 + $0x178] sm:$0xff]
        %v287 = vld [vmem:[%s222 + $0x180] sm:$0xff]
        %v288 = vld [vmem:[%s222 + $0x188] sm:$0xff]
        %v289 = vld [vmem:[%s222 + $0x190] sm:$0xff]
        %v290 = vld [vmem:[%s222 + $0x198] sm:$0xff]
        %v291 = vld [vmem:[%s222 + $0x1a0] sm:$0xff]
        %v292 = vld [vmem:[%s222 + $0x1a8] sm:$0xff]
        %v293 = vld [vmem:[%s222 + $0x1b0] sm:$0xff]
        %v294 = vld [vmem:[%s222 + $0x1b8] sm:$0xff]
        %v295 = vld [vmem:[%s222 + $0x1c0] sm:$0xff]
        %v296 = vld [vmem:[%s222 + $0x1c8] sm:$0xff]
        %v297 = vld [vmem:[%s222 + $0x1d0] sm:$0xff]
        %v298 = vld [vmem:[%s222 + $0x1d8] sm:$0xff]
        %v299 = vld [vmem:[%s222 + $0x1e0] sm:$0xff]
        %v300 = vld [vmem:[%s222 + $0x1e8] sm:$0xff]
        %v301 = vld [vmem:[%s222 + $0x1f0] sm:$0xff]
        %v302 = vld [vmem:[%s222 + $0x1f8] sm:$0xff]
        %v303 = vld [vmem:[%s227] sm:$0xf]
        %v305 = vlaneseq
        %v306 = vshrl.u32 %v305, 7
        %v307 = vsub.s32 0, %v306
        %v308 = vrot.slane %v303, %v307
        %v309 = vlaneseq
        %v310 = vshrl.u32 %v309, 7
        %v311 = vsub.s32 1, %v310
        %v312 = vrot.slane %v303, %v311
        %v313 = vlaneseq
        %v314 = vshrl.u32 %v313, 7
        %v315 = vsub.s32 2, %v314
        %v316 = vrot.slane %v303, %v315
        %v317 = vlaneseq
        %v318 = vshrl.u32 %v317, 7
        %v319 = vsub.s32 3, %v318
        %v320 = vrot.slane %v303, %v319
        %v333 = vunpack.c.l.b16 %v231
        %v334 = vunpack.c.h.b16 %v231
        %v335 = vunpack.c.l.b16 %v232
        %v336 = vunpack.c.h.b16 %v232
        %v337 = vunpack.c.l.b16 %v233
        %v338 = vunpack.c.h.b16 %v233
        %v339 = vunpack.c.l.b16 %v234
        %v340 = vunpack.c.h.b16 %v234
        %v341 = vunpack.c.l.b16 %v235
        %v342 = vunpack.c.h.b16 %v235
        %v343 = vunpack.c.l.b16 %v236
        %v344 = vunpack.c.h.b16 %v236
        %v345 = vunpack.c.l.b16 %v237
        %v346 = vunpack.c.h.b16 %v237
        %v347 = vunpack.c.l.b16 %v238
        %v348 = vunpack.c.h.b16 %v238
        %v349 = vpack.c.b16 %v335, %v333
        %v350 = vpack.c.b16 %v336, %v334
        %v351 = vpack.c.b16 %v339, %v337
        %v352 = vpack.c.b16 %v340, %v338
        %v353 = vpack.c.b16 %v343, %v341
        %v354 = vpack.c.b16 %v344, %v342
        %v355 = vpack.c.b16 %v347, %v345
        %v356 = vpack.c.b16 %v348, %v346
        %v429 = vunpack.c.l.b16 %v239
        %v430 = vunpack.c.h.b16 %v239
        %v431 = vunpack.c.l.b16 %v240
        %v432 = vunpack.c.h.b16 %v240
        %v433 = vunpack.c.l.b16 %v241
        %v434 = vunpack.c.h.b16 %v241
        %v435 = vunpack.c.l.b16 %v242
        %v436 = vunpack.c.h.b16 %v242
        %v437 = vunpack.c.l.b16 %v243
        %v438 = vunpack.c.h.b16 %v243
        %v439 = vunpack.c.l.b16 %v244
        %v440 = vunpack.c.h.b16 %v244
        %v441 = vunpack.c.l.b16 %v245
        %v442 = vunpack.c.h.b16 %v245
        %v443 = vunpack.c.l.b16 %v246
        %v444 = vunpack.c.h.b16 %v246
        %v445 = vunpack.c.l.b16 %v247
        %v446 = vunpack.c.h.b16 %v247
        %v447 = vunpack.c.l.b16 %v248
        %v448 = vunpack.c.h.b16 %v248
        %v449 = vunpack.c.l.b16 %v249
        %v450 = vunpack.c.h.b16 %v249
        %v451 = vunpack.c.l.b16 %v250
        %v452 = vunpack.c.h.b16 %v250
        %v453 = vunpack.c.l.b16 %v251
        %v454 = vunpack.c.h.b16 %v251
        %v455 = vunpack.c.l.b16 %v252
        %v456 = vunpack.c.h.b16 %v252
        %v457 = vunpack.c.l.b16 %v253
        %v458 = vunpack.c.h.b16 %v253
        %v459 = vunpack.c.l.b16 %v254
        %v460 = vunpack.c.h.b16 %v254
        %v461 = vunpack.c.l.b16 %v255
        %v462 = vunpack.c.h.b16 %v255
        %v463 = vunpack.c.l.b16 %v256
        %v464 = vunpack.c.h.b16 %v256
        %v465 = vunpack.c.l.b16 %v257
        %v466 = vunpack.c.h.b16 %v257
        %v467 = vunpack.c.l.b16 %v258
        %v468 = vunpack.c.h.b16 %v258
        %v469 = vunpack.c.l.b16 %v259
        %v470 = vunpack.c.h.b16 %v259
        %v471 = vunpack.c.l.b16 %v260
        %v472 = vunpack.c.h.b16 %v260
        %v473 = vunpack.c.l.b16 %v261
        %v474 = vunpack.c.h.b16 %v261
        %v475 = vunpack.c.l.b16 %v262
        %v476 = vunpack.c.h.b16 %v262
        %v477 = vunpack.c.l.b16 %v263
        %v478 = vunpack.c.h.b16 %v263
        %v479 = vunpack.c.l.b16 %v264
        %v480 = vunpack.c.h.b16 %v264
        %v481 = vunpack.c.l.b16 %v265
        %v482 = vunpack.c.h.b16 %v265
        %v483 = vunpack.c.l.b16 %v266
        %v484 = vunpack.c.h.b16 %v266
        %v485 = vunpack.c.l.b16 %v267
        %v486 = vunpack.c.h.b16 %v267
        %v487 = vunpack.c.l.b16 %v268
        %v488 = vunpack.c.h.b16 %v268
        %v489 = vunpack.c.l.b16 %v269
        %v490 = vunpack.c.h.b16 %v269
        %v491 = vunpack.c.l.b16 %v270
        %v492 = vunpack.c.h.b16 %v270
        %v493 = vunpack.c.l.b16 %v271
        %v494 = vunpack.c.h.b16 %v271
        %v495 = vunpack.c.l.b16 %v272
        %v496 = vunpack.c.h.b16 %v272
        %v497 = vunpack.c.l.b16 %v273
        %v498 = vunpack.c.h.b16 %v273
        %v499 = vunpack.c.l.b16 %v274
        %v500 = vunpack.c.h.b16 %v274
        %v501 = vunpack.c.l.b16 %v275
        %v502 = vunpack.c.h.b16 %v275
        %v503 = vunpack.c.l.b16 %v276
        %v504 = vunpack.c.h.b16 %v276
        %v505 = vunpack.c.l.b16 %v277
        %v506 = vunpack.c.h.b16 %v277
        %v507 = vunpack.c.l.b16 %v278
        %v508 = vunpack.c.h.b16 %v278
        %v509 = vunpack.c.l.b16 %v279
        %v510 = vunpack.c.h.b16 %v279
        %v511 = vunpack.c.l.b16 %v280
        %v512 = vunpack.c.h.b16 %v280
        %v513 = vunpack.c.l.b16 %v281
        %v514 = vunpack.c.h.b16 %v281
        %v515 = vunpack.c.l.b16 %v282
        %v516 = vunpack.c.h.b16 %v282
        %v517 = vunpack.c.l.b16 %v283
        %v518 = vunpack.c.h.b16 %v283
        %v519 = vunpack.c.l.b16 %v284
        %v520 = vunpack.c.h.b16 %v284
        %v521 = vunpack.c.l.b16 %v285
        %v522 = vunpack.c.h.b16 %v285
        %v523 = vunpack.c.l.b16 %v286
        %v524 = vunpack.c.h.b16 %v286
        %v525 = vunpack.c.l.b16 %v287
        %v526 = vunpack.c.h.b16 %v287
        %v527 = vunpack.c.l.b16 %v288
        %v528 = vunpack.c.h.b16 %v288
        %v529 = vunpack.c.l.b16 %v289
        %v530 = vunpack.c.h.b16 %v289
        %v531 = vunpack.c.l.b16 %v290
        %v532 = vunpack.c.h.b16 %v290
        %v533 = vunpack.c.l.b16 %v291
        %v534 = vunpack.c.h.b16 %v291
        %v535 = vunpack.c.l.b16 %v292
        %v536 = vunpack.c.h.b16 %v292
        %v537 = vunpack.c.l.b16 %v293
        %v538 = vunpack.c.h.b16 %v293
        %v539 = vunpack.c.l.b16 %v294
        %v540 = vunpack.c.h.b16 %v294
        %v541 = vunpack.c.l.b16 %v295
        %v542 = vunpack.c.h.b16 %v295
        %v543 = vunpack.c.l.b16 %v296
        %v544 = vunpack.c.h.b16 %v296
        %v545 = vunpack.c.l.b16 %v297
        %v546 = vunpack.c.h.b16 %v297
        %v547 = vunpack.c.l.b16 %v298
        %v548 = vunpack.c.h.b16 %v298
        %v549 = vunpack.c.l.b16 %v299
        %v550 = vunpack.c.h.b16 %v299
        %v551 = vunpack.c.l.b16 %v300
        %v552 = vunpack.c.h.b16 %v300
        %v553 = vunpack.c.l.b16 %v301
        %v554 = vunpack.c.h.b16 %v301
        %v555 = vunpack.c.l.b16 %v302
        %v556 = vunpack.c.h.b16 %v302
        %v557 = vpack.c.b16 %v433, %v429
        %v558 = vpack.c.b16 %v434, %v430
        %v559 = vpack.c.b16 %v435, %v431
        %v560 = vpack.c.b16 %v436, %v432
        %v561 = vpack.c.b16 %v441, %v437
        %v562 = vpack.c.b16 %v442, %v438
        %v563 = vpack.c.b16 %v443, %v439
        %v564 = vpack.c.b16 %v444, %v440
        %v565 = vpack.c.b16 %v449, %v445
        %v566 = vpack.c.b16 %v450, %v446
        %v567 = vpack.c.b16 %v451, %v447
        %v568 = vpack.c.b16 %v452, %v448
        %v569 = vpack.c.b16 %v457, %v453
        %v570 = vpack.c.b16 %v458, %v454
        %v571 = vpack.c.b16 %v459, %v455
        %v572 = vpack.c.b16 %v460, %v456
        %v573 = vpack.c.b16 %v465, %v461
        %v574 = vpack.c.b16 %v466, %v462
        %v575 = vpack.c.b16 %v467, %v463
        %v576 = vpack.c.b16 %v468, %v464
        %v577 = vpack.c.b16 %v473, %v469
        %v578 = vpack.c.b16 %v474, %v470
        %v579 = vpack.c.b16 %v475, %v471
        %v580 = vpack.c.b16 %v476, %v472
        %v581 = vpack.c.b16 %v481, %v477
        %v582 = vpack.c.b16 %v482, %v478
        %v583 = vpack.c.b16 %v483, %v479
        %v584 = vpack.c.b16 %v484, %v480
        %v585 = vpack.c.b16 %v489, %v485
        %v586 = vpack.c.b16 %v490, %v486
        %v587 = vpack.c.b16 %v491, %v487
        %v588 = vpack.c.b16 %v492, %v488
        %v589 = vpack.c.b16 %v497, %v493
        %v590 = vpack.c.b16 %v498, %v494
        %v591 = vpack.c.b16 %v499, %v495
        %v592 = vpack.c.b16 %v500, %v496
        %v593 = vpack.c.b16 %v505, %v501
        %v594 = vpack.c.b16 %v506, %v502
        %v595 = vpack.c.b16 %v507, %v503
        %v596 = vpack.c.b16 %v508, %v504
        %v597 = vpack.c.b16 %v513, %v509
        %v598 = vpack.c.b16 %v514, %v510
        %v599 = vpack.c.b16 %v515, %v511
        %v600 = vpack.c.b16 %v516, %v512
        %v601 = vpack.c.b16 %v521, %v517
        %v602 = vpack.c.b16 %v522, %v518
        %v603 = vpack.c.b16 %v523, %v519
        %v604 = vpack.c.b16 %v524, %v520
        %v605 = vpack.c.b16 %v529, %v525
        %v606 = vpack.c.b16 %v530, %v526
        %v607 = vpack.c.b16 %v531, %v527
        %v608 = vpack.c.b16 %v532, %v528
        %v609 = vpack.c.b16 %v537, %v533
        %v610 = vpack.c.b16 %v538, %v534
        %v611 = vpack.c.b16 %v539, %v535
        %v612 = vpack.c.b16 %v540, %v536
        %v613 = vpack.c.b16 %v545, %v541
        %v614 = vpack.c.b16 %v546, %v542
        %v615 = vpack.c.b16 %v547, %v543
        %v616 = vpack.c.b16 %v548, %v544
        %v617 = vpack.c.b16 %v553, %v549
        %v618 = vpack.c.b16 %v554, %v550
        %v619 = vpack.c.b16 %v555, %v551
        %v620 = vpack.c.b16 %v556, %v552
        %685 = vmatprep.subr.bf16.mxu0 %v586
        %686 = vmatpush1.bf16.msra.mxu0 %v585
        %687 = vmatprep.subr.bf16.mxu0 %v582
        %688 = vmatpush1.bf16.msra.mxu0 %v581
        %689 = vmatprep.subr.bf16.mxu0 %v578
        %690 = vmatpush1.bf16.msra.mxu0 %v577
        %691 = vmatprep.subr.bf16.mxu0 %v574
        %692 = vmatpush1.bf16.msra.mxu0 %v573
        %693 = vmatprep.subr.bf16.mxu0 %v570
        %694 = vmatpush1.bf16.msra.mxu0 %v569
        %695 = vmatprep.subr.bf16.mxu0 %v566
        %696 = vmatpush1.bf16.msra.mxu0 %v565
        %697 = vmatprep.subr.bf16.mxu0 %v562
        %698 = vmatpush1.bf16.msra.mxu0 %v561
        %699 = vmatprep.subr.bf16.mxu0 %v558
        %700 = vmatpush1.bf16.msra.mxu0 %v557
        %701 = vmatprep.subr.bf16.mxu0 %v618
        %702 = vmatpush2.bf16.msra.mxu0 %v617
        %703 = vmatprep.subr.bf16.mxu0 %v614
        %704 = vmatpush2.bf16.msra.mxu0 %v613
        %705 = vmatprep.subr.bf16.mxu0 %v610
        %706 = vmatpush2.bf16.msra.mxu0 %v609
        %707 = vmatprep.subr.bf16.mxu0 %v606
        %708 = vmatpush2.bf16.msra.mxu0 %v605
        %709 = vmatprep.subr.bf16.mxu0 %v602
        %710 = vmatpush2.bf16.msra.mxu0 %v601
        %711 = vmatprep.subr.bf16.mxu0 %v598
        %712 = vmatpush2.bf16.msra.mxu0 %v597
        %713 = vmatprep.subr.bf16.mxu0 %v594
        %714 = vmatpush2.bf16.msra.mxu0 %v593
        %715 = vmatprep.subr.bf16.mxu0 %v590
        %716 = vmatpush2.bf16.msra.mxu0 %v589
        %717 = vmatprep.mubr.bf16.mxu0 %v350
        %718 = vmatmul.mubr.bf16.gmra.mxu0 %v349
        %v719 = vpop.f32.mrf.mxu0
        %v720 = vadd.f32 %v308, %v719
        %v721 = vpop.f32.mrf.mxu0
        %v722 = vadd.f32 %v312, %v721
        %v723 = vpop.f32.mrf.mxu0
        %v724 = vadd.f32 %v308, %v723
        %v725 = vpop.f32.mrf.mxu0
        %v726 = vadd.f32 %v312, %v725
        %727 = vmatprep.mubr.bf16.mxu0 %v352
        %728 = vmatmul.mubr.bf16.gmra.mxu0 %v351
        %v729 = vpop.f32.mrf.mxu0
        %v730 = vadd.f32 %v308, %v729
        %v731 = vpop.f32.mrf.mxu0
        %v732 = vadd.f32 %v312, %v731
        %v733 = vpop.f32.mrf.mxu0
        %v734 = vadd.f32 %v308, %v733
        %v735 = vpop.f32.mrf.mxu0
        %v736 = vadd.f32 %v312, %v735
        %737 = vmatprep.mubr.bf16.mxu0 %v354
        %738 = vmatmul.mubr.bf16.gmra.mxu0 %v353
        %v739 = vpop.f32.mrf.mxu0
        %v740 = vadd.f32 %v308, %v739
        %v741 = vpop.f32.mrf.mxu0
        %v742 = vadd.f32 %v312, %v741
        %v743 = vpop.f32.mrf.mxu0
        %v744 = vadd.f32 %v308, %v743
        %v745 = vpop.f32.mrf.mxu0
        %v746 = vadd.f32 %v312, %v745
        %747 = vmatprep.mubr.bf16.mxu0 %v356
        %748 = vmatmul.mubr.bf16.gmra.mxu0 %v355
        %v749 = vpop.f32.mrf.mxu0
        %v750 = vadd.f32 %v308, %v749
        %v751 = vpop.f32.mrf.mxu0
        %v752 = vadd.f32 %v312, %v751
        %v753 = vpop.f32.mrf.mxu0
        %v754 = vadd.f32 %v308, %v753
        %v755 = vpop.f32.mrf.mxu0
        %v756 = vadd.f32 %v312, %v755
        %757 = vdwg.mxu0
        %758 = vmatprep.subr.bf16.mxu0 %v588
        %759 = vmatpush1.bf16.msra.mxu0 %v587
        %760 = vmatprep.subr.bf16.mxu0 %v584
        %761 = vmatpush1.bf16.msra.mxu0 %v583
        %762 = vmatprep.subr.bf16.mxu0 %v580
        %763 = vmatpush1.bf16.msra.mxu0 %v579
        %764 = vmatprep.subr.bf16.mxu0 %v576
        %765 = vmatpush1.bf16.msra.mxu0 %v575
        %766 = vmatprep.subr.bf16.mxu0 %v572
        %767 = vmatpush1.bf16.msra.mxu0 %v571
        %768 = vmatprep.subr.bf16.mxu0 %v568
        %769 = vmatpush1.bf16.msra.mxu0 %v567
        %770 = vmatprep.subr.bf16.mxu0 %v564
        %771 = vmatpush1.bf16.msra.mxu0 %v563
        %772 = vmatprep.subr.bf16.mxu0 %v560
        %773 = vmatpush1.bf16.msra.mxu0 %v559
        %774 = vmatprep.subr.bf16.mxu0 %v620
        %775 = vmatpush2.bf16.msra.mxu0 %v619
        %776 = vmatprep.subr.bf16.mxu0 %v616
        %777 = vmatpush2.bf16.msra.mxu0 %v615
        %778 = vmatprep.subr.bf16.mxu0 %v612
        %779 = vmatpush2.bf16.msra.mxu0 %v611
        %780 = vmatprep.subr.bf16.mxu0 %v608
        %781 = vmatpush2.bf16.msra.mxu0 %v607
        %782 = vmatprep.subr.bf16.mxu0 %v604
        %783 = vmatpush2.bf16.msra.mxu0 %v603
        %784 = vmatprep.subr.bf16.mxu0 %v600
        %785 = vmatpush2.bf16.msra.mxu0 %v599
        %786 = vmatprep.subr.bf16.mxu0 %v596
        %787 = vmatpush2.bf16.msra.mxu0 %v595
        %788 = vmatprep.subr.bf16.mxu0 %v592
        %789 = vmatpush2.bf16.msra.mxu0 %v591
        %790 = vmatprep.mubr.bf16.mxu0 %v350
        %791 = vmatmul.mubr.bf16.gmra.mxu0 %v349
        %v792 = vpop.f32.mrf.mxu0
        %v793 = vadd.f32 %v316, %v792
        %v794 = vpop.f32.mrf.mxu0
        %v795 = vadd.f32 %v320, %v794
        %v796 = vpop.f32.mrf.mxu0
        %v797 = vadd.f32 %v316, %v796
        %v798 = vpop.f32.mrf.mxu0
        %v799 = vadd.f32 %v320, %v798
        %800 = vmatprep.mubr.bf16.mxu0 %v352
        %801 = vmatmul.mubr.bf16.gmra.mxu0 %v351
        %v802 = vpop.f32.mrf.mxu0
        %v803 = vadd.f32 %v316, %v802
        %v804 = vpop.f32.mrf.mxu0
        %v805 = vadd.f32 %v320, %v804
        %v806 = vpop.f32.mrf.mxu0
        %v807 = vadd.f32 %v316, %v806
        %v808 = vpop.f32.mrf.mxu0
        %v809 = vadd.f32 %v320, %v808
        %810 = vmatprep.mubr.bf16.mxu0 %v354
        %811 = vmatmul.mubr.bf16.gmra.mxu0 %v353
        %v812 = vpop.f32.mrf.mxu0
        %v813 = vadd.f32 %v316, %v812
        %v814 = vpop.f32.mrf.mxu0
        %v815 = vadd.f32 %v320, %v814
        %v816 = vpop.f32.mrf.mxu0
        %v817 = vadd.f32 %v316, %v816
        %v818 = vpop.f32.mrf.mxu0
        %v819 = vadd.f32 %v320, %v818
        %820 = vmatprep.mubr.bf16.mxu0 %v356
        %821 = vmatmul.mubr.bf16.gmra.mxu0 %v355
        %v822 = vpop.f32.mrf.mxu0
        %v823 = vadd.f32 %v316, %v822
        %v824 = vpop.f32.mrf.mxu0
        %v825 = vadd.f32 %v320, %v824
        %v826 = vpop.f32.mrf.mxu0
        %v827 = vadd.f32 %v316, %v826
        %v828 = vpop.f32.mrf.mxu0
        %v829 = vadd.f32 %v320, %v828
        %830 = vdwg.mxu0
        %v831 = vxor.u32 %v793, 2147483648
        %v832 = vxor.u32 %v795, 2147483648
        %v833 = vxor.u32 %v797, 2147483648
        %v834 = vxor.u32 %v799, 2147483648
        %v835 = vxor.u32 %v803, 2147483648
        %v836 = vxor.u32 %v805, 2147483648
        %v837 = vxor.u32 %v807, 2147483648
        %v838 = vxor.u32 %v809, 2147483648
        %v839 = vxor.u32 %v813, 2147483648
        %v840 = vxor.u32 %v815, 2147483648
        %v841 = vxor.u32 %v817, 2147483648
        %v842 = vxor.u32 %v819, 2147483648
        %v843 = vxor.u32 %v823, 2147483648
        %v844 = vxor.u32 %v825, 2147483648
        %v845 = vxor.u32 %v827, 2147483648
        %v846 = vxor.u32 %v829, 2147483648
        %v847 = vmul.f32 %v831, 1.442695
        %v848 = vpow.pop %v847
        %v849 = vmul.f32 %v832, 1.442695
        %v850 = vpow.pop %v849
        %v851 = vmul.f32 %v833, 1.442695
        %v852 = vpow.pop %v851
        %v853 = vmul.f32 %v834, 1.442695
        %v854 = vpow.pop %v853
        %v855 = vmul.f32 %v835, 1.442695
        %v856 = vpow.pop %v855
        %v857 = vmul.f32 %v836, 1.442695
        %v858 = vpow.pop %v857
        %v859 = vmul.f32 %v837, 1.442695
        %v860 = vpow.pop %v859
        %v861 = vmul.f32 %v838, 1.442695
        %v862 = vpow.pop %v861
        %v863 = vmul.f32 %v839, 1.442695
        %v864 = vpow.pop %v863
        %v865 = vmul.f32 %v840, 1.442695
        %v866 = vpow.pop %v865
        %v867 = vmul.f32 %v841, 1.442695
        %v868 = vpow.pop %v867
        %v869 = vmul.f32 %v842, 1.442695
        %v870 = vpow.pop %v869
        %v871 = vmul.f32 %v843, 1.442695
        %v872 = vpow.pop %v871
        %v873 = vmul.f32 %v844, 1.442695
        %v874 = vpow.pop %v873
        %v875 = vmul.f32 %v845, 1.442695
        %v876 = vpow.pop %v875
        %v877 = vmul.f32 %v846, 1.442695
        %v878 = vpow.pop %v877
        %v879 = vadd.f32 %v848, 1.0
        %v880 = vadd.f32 %v850, 1.0
        %v881 = vadd.f32 %v852, 1.0
        %v882 = vadd.f32 %v854, 1.0
        %v883 = vadd.f32 %v856, 1.0
        %v884 = vadd.f32 %v858, 1.0
        %v885 = vadd.f32 %v860, 1.0
        %v886 = vadd.f32 %v862, 1.0
        %v887 = vadd.f32 %v864, 1.0
        %v888 = vadd.f32 %v866, 1.0
        %v889 = vadd.f32 %v868, 1.0
        %v890 = vadd.f32 %v870, 1.0
        %v891 = vadd.f32 %v872, 1.0
        %v892 = vadd.f32 %v874, 1.0
        %v893 = vadd.f32 %v876, 1.0
        %v894 = vadd.f32 %v878, 1.0
        %v895 = vrcp.pop %v879
        %v896 = vmul.f32 1.0, %v895
        %v897 = vrcp.pop %v880
        %v898 = vmul.f32 1.0, %v897
        %v899 = vrcp.pop %v881
        %v900 = vmul.f32 1.0, %v899
        %v901 = vrcp.pop %v882
        %v902 = vmul.f32 1.0, %v901
        %v903 = vrcp.pop %v883
        %v904 = vmul.f32 1.0, %v903
        %v905 = vrcp.pop %v884
        %v906 = vmul.f32 1.0, %v905
        %v907 = vrcp.pop %v885
        %v908 = vmul.f32 1.0, %v907
        %v909 = vrcp.pop %v886
        %v910 = vmul.f32 1.0, %v909
        %v911 = vrcp.pop %v887
        %v912 = vmul.f32 1.0, %v911
        %v913 = vrcp.pop %v888
        %v914 = vmul.f32 1.0, %v913
        %v915 = vrcp.pop %v889
        %v916 = vmul.f32 1.0, %v915
        %v917 = vrcp.pop %v890
        %v918 = vmul.f32 1.0, %v917
        %v919 = vrcp.pop %v891
        %v920 = vmul.f32 1.0, %v919
        %v921 = vrcp.pop %v892
        %v922 = vmul.f32 1.0, %v921
        %v923 = vrcp.pop %v893
        %v924 = vmul.f32 1.0, %v923
        %v925 = vrcp.pop %v894
        %v926 = vmul.f32 1.0, %v925
        %v927 = vmul.f32 %v896, %v720
        %v928 = vmul.f32 %v898, %v722
        %v929 = vmul.f32 %v900, %v724
        %v930 = vmul.f32 %v902, %v726
        %v931 = vmul.f32 %v904, %v730
        %v932 = vmul.f32 %v906, %v732
        %v933 = vmul.f32 %v908, %v734
        %v934 = vmul.f32 %v910, %v736
        %v935 = vmul.f32 %v912, %v740
        %v936 = vmul.f32 %v914, %v742
        %v937 = vmul.f32 %v916, %v744
        %v938 = vmul.f32 %v918, %v746
        %v939 = vmul.f32 %v920, %v750
        %v940 = vmul.f32 %v922, %v752
        %v941 = vmul.f32 %v924, %v754
        %v942 = vmul.f32 %v926, %v756
        %v943 = vpack.c.bf16 %v929, %v927
        %v944 = vpack.c.bf16 %v930, %v928
        %v945 = vpack.c.bf16 %v933, %v931
        %v946 = vpack.c.bf16 %v934, %v932
        %v947 = vpack.c.bf16 %v937, %v935
        %v948 = vpack.c.bf16 %v938, %v936
        %v949 = vpack.c.bf16 %v941, %v939
        %v950 = vpack.c.bf16 %v942, %v940
        %v959 = vunpack.c.l.b16 %v943
        %v960 = vunpack.c.l.b16 %v944
        %v961 = vunpack.c.h.b16 %v943
        %v962 = vunpack.c.h.b16 %v944
        %v963 = vunpack.c.l.b16 %v945
        %v964 = vunpack.c.l.b16 %v946
        %v965 = vunpack.c.h.b16 %v945
        %v966 = vunpack.c.h.b16 %v946
        %v967 = vunpack.c.l.b16 %v947
        %v968 = vunpack.c.l.b16 %v948
        %v969 = vunpack.c.h.b16 %v947
        %v970 = vunpack.c.h.b16 %v948
        %v971 = vunpack.c.l.b16 %v949
        %v972 = vunpack.c.l.b16 %v950
        %v973 = vunpack.c.h.b16 %v949
        %v974 = vunpack.c.h.b16 %v950
        %v975 = vpack.c.b16 %v960, %v959
        %v976 = vpack.c.b16 %v962, %v961
        %v977 = vpack.c.b16 %v964, %v963
        %v978 = vpack.c.b16 %v966, %v965
        %v979 = vpack.c.b16 %v968, %v967
        %v980 = vpack.c.b16 %v970, %v969
        %v981 = vpack.c.b16 %v972, %v971
        %v982 = vpack.c.b16 %v974, %v973
        %991 = vst [vmem:[%s210] sm:$0xff] %v975
        %992 = vst [vmem:[%s210 + $0x8] sm:$0xff] %v976
        %993 = vst [vmem:[%s210 + $0x10] sm:$0xff] %v977
        %994 = vst [vmem:[%s210 + $0x18] sm:$0xff] %v978
        %995 = vst [vmem:[%s210 + $0x20] sm:$0xff] %v979
        %996 = vst [vmem:[%s210 + $0x28] sm:$0xff] %v980
        %997 = vst [vmem:[%s210 + $0x30] sm:$0xff] %v981
        %998 = vst [vmem:[%s210 + $0x38] sm:$0xff] %v982
        %s999 = sand.u32 %s117, 1
        %s1000 = scalar_lea.sflag [#allocation3], %s999
        %s1001 = sand.u32 %s117, 1
        %s1002 = smul.addr %s1001, 64
        %s1003 = scalar_lea.vmem [#allocation2], %s1002
        // Predicated region
        $region33: #{gated_highway.1} parent=31 // pred_check
          %p1004 = pneg %p127
        $region34: #{gated_highway.1} parent=31 // pred_check_branch
          %1006 = sbr.rel (%p1004) target = $region36
        $region35: #{gated_highway.1} parent=31 // pred_region
          %s1007 = smul.u32 8, %s21
          %s1008 = smul.u32 2, %s22
          %s1010 = ssub.s32 1024, 1024
          %1011 = vsyncadd %s1000, %s1010
          %s1012 = smul.addr %s1007, 2
          %s1013 = sadd.s32 %s1008, %s1012
          %s1014 = smul.addr %s1013, 64
          %s1015 = scalar_lea.hbm %s3, %s1014
          %s1016 = sshll.u32 %s1003, 4
          %s1017 = int_to_ptr.vmem [resolvable:$true] %s1016
          %1022 = dma.vmem_to_hbm [thread:$0]  %s1017, 1024, %s1015, %s1000, 128, 128, 8
        $region36: #{gated_highway.1} parent=31 // pred_fallthru
          _
      $region32: #{gated_highway.1} parent=5 // pred_fallthru
        _
      %p1023 = scmp.le.s32.totalorder 2, %s12
      // Predicated region
      $region37: #{gated_highway.1} parent=5 // pred_check
        %p1024 = pneg %p1023
      $region38: #{gated_highway.1} parent=5 // pred_check_branch
        %1026 = sbr.rel (%p1024) target = $region40
      $region39: #{gated_highway.1} parent=5 // pred_region
        %s1027 = ssub.s32 %s12, 2
        // Predicated region
        $region41: #{gated_highway.1} parent=39 // pred_check
          %p1028 = pneg %p133
        $region42: #{gated_highway.1} parent=39 // pred_check_branch
          %1030 = sbr.rel (%p1028) target = $region44
        $region43: #{gated_highway.1} parent=39 // pred_region
          %s1031 = sand.u32 %s118, 1
          %s1032 = scalar_lea.sflag [#allocation3], %s1031
          %s1033 = sand.u32 %s118, 1
          %s1034 = smul.addr %s1033, 64
          %s1035 = scalar_lea.vmem [#allocation2], %s1034
          %1036 = dma.done %s1032, 1024
        $region44: #{gated_highway.1} parent=39 // pred_fallthru
          _
      $region40: #{gated_highway.1} parent=5 // pred_fallthru
        _
    $region6: #{gated_highway.1} parent=1 // loop_footer
      %s16 = sadd.s32 1, %s12
    $region7: #{gated_highway.1} parent=1 // loop_footer_branch
      %11 = sbr.rel target = $region3
    $region8: #{gated_highway.1} parent=1 // loop_exit
      _
    %1037 = vsyncpa [#allocation3], 1
    %s1038 = scalar_lea.sflag [#allocation3], 1
    %1039 = vsyncpa %s1038, 1

</llo_original>
